<compile_context>
chip_gen: v7x
topology: tpu7x:2x2x1
jax: 0.10.0
libtpu: 0.0.40
codegen_flags: <defaults>
</compile_context>

<pallas_src>
import functools
import math

import jax
import jax.numpy as jnp
from jax.experimental import pallas as pl
from jax.experimental.pallas import tpu as pltpu


def _conv2d_dfa_kernel(x_ref, w_ref, o_ref, rhs_ref, *, K, W, Cin, P):
    # x_ref  : (1, Cin, H*W)     one image, NCHW flattened over (H, W)
    # w_ref  : (Cout, K*K*Cin)   weight, columns ordered (kh, kw, ci)
    # o_ref  : (1, Cout, P)      P = (Ho-1)*W + Wo  ("over-wide" flat output)
    # rhs_ref: (K*K*Cin, P)      VMEM im2col scratch
    for kh in range(K):
        for kw in range(K):
            t = kh * K + kw
            off = kh * W + kw  # flat tap shift; off + P <= H*W by construction
            rhs_ref[t * Cin:(t + 1) * Cin, :] = x_ref[0, :, off:off + P]
    # One MXU push: contraction depth K*K*Cin, lane-dense (Cout, P) result.
    o_ref[0] = jnp.dot(
        w_ref[...], rhs_ref[...], preferred_element_type=jnp.float32
    ).astype(o_ref.dtype)


def conv2d_dfa_forward(x_nchw, w_oihw):
    """Forward of Conv2dDFA: conv2d(x, w), no bias, stride 1, VALID padding."""
    N, Cin, H, W = x_nchw.shape
    Cout, Cin_w, K, K2 = w_oihw.shape
    assert Cin == Cin_w and K == K2
    Ho, Wo = H - K + 1, W - K + 1
    KK = K * K
    # Flat "over-wide" output width: covers all valid flat positions
    # p = ho*W + wo (wo < Wo); guarantees every tap slice stays in bounds.
    P = (Ho - 1) * W + Wo

    # ---- cheap glue in plain JAX (no K*K duplication, no transposes of x) ----
    x_flat = x_nchw.reshape(N, Cin, H * W)                       # free reshape
    # weight -> (Cout, KK*Cin), column index = (kh*K + kw)*Cin + ci
    w_mat = jnp.transpose(w_oihw, (0, 2, 3, 1)).reshape(Cout, KK * Cin)

    kernel = functools.partial(_conv2d_dfa_kernel, K=K, W=W, Cin=Cin, P=P)
    out_flat = pl.pallas_call(
        kernel,
        out_shape=jax.ShapeDtypeStruct((N, Cout, P), x_nchw.dtype),
        grid_spec=pltpu.PrefetchScalarGridSpec(
            num_scalar_prefetch=0,
            grid=(N,),
            in_specs=[
                pl.BlockSpec((1, Cin, H * W), lambda n: (n, 0, 0)),
                pl.BlockSpec((Cout, KK * Cin), lambda n: (0, 0)),
            ],
            out_specs=pl.BlockSpec((1, Cout, P), lambda n: (n, 0, 0)),
            scratch_shapes=[pltpu.VMEM((KK * Cin, P), jnp.float32)],
        ),
        compiler_params=pltpu.CompilerParams(
            dimension_semantics=("parallel",),
        ),
    )(x_flat, w_mat)

    # Un-flatten: valid outputs live at flat position ho*W + wo with wo < Wo.
    out_padded = jnp.pad(out_flat, ((0, 0), (0, 0), (0, K - 1)))  # -> Ho*W cols
    return out_padded.reshape(N, Cout, Ho, W)[:, :, :, :Wo]       # NCHW output


def kaiming_uniform_weight(key, out_c, in_c, k):
    # torch.nn.init.kaiming_uniform_ defaults: a=0, fan_in, leaky_relu
    fan_in = in_c * k * k
    gain = math.sqrt(2.0)
    bound = gain * math.sqrt(3.0 / fan_in)
    return jax.random.uniform(
        key, (out_c, in_c, k, k), jnp.float32, minval=-bound, maxval=bound
    )


if __name__ == "__main__":
    key = jax.random.PRNGKey(0)
    kx, kw = jax.random.split(key)

    N, Cin, H, W = 2, 4, 16, 16
    Cout, K = 8, 3

    x = jax.random.normal(kx, (N, Cin, H, W), dtype=jnp.float32)
    w = kaiming_uniform_weight(kw, Cout, Cin, K)

    out = conv2d_dfa_forward(x, w)
    out = jax.block_until_ready(out)

    # Correctness check against XLA's convolution (same semantics as F.conv2d).
    ref = jax.lax.conv(x, w, window_strides=(1, 1), padding="VALID")
    assert out.shape == ref.shape == (N, Cout, H - K + 1, W - K + 1)
    assert jnp.allclose(out, ref, atol=1e-4, rtol=1e-4)

    print("KERNEL_OK")
</pallas_src>

<mosaic_0001>
module attributes {stable_mosaic.version = 11 : i64} {
  func.func @_conv2d_dfa_kernel(%arg0: i32, %arg1: memref<1x4x256xf32, #tpu.memory_space<vmem>>, %arg2: memref<8x36xf32, #tpu.memory_space<vmem>>, %arg3: memref<1x8x222xf32, #tpu.memory_space<vmem>>, %arg4: memref<36x222xf32, #tpu.memory_space<vmem>>) attributes {dimension_semantics = [#tpu.dimension_semantics<parallel>], iteration_bounds = array<i64: 2>, scalar_prefetch = 0 : i64, scratch_operands = 1 : i64, tpu.core_type = #tpu.core_type<tc>, window_params = [{transform_indices = @transform_0, window_bounds = array<i64: 1, 4, 256>}, {pipeline_mode = #tpu.pipeline_mode<synchronous>, transform_indices = @transform_1, window_bounds = array<i64: 8, 36>}, {transform_indices = @transform_2, window_bounds = array<i64: 1, 8, 222>}]} {
    %c0 = arith.constant 0 : index
    %c0_0 = arith.constant 0 : index
    %c0_1 = arith.constant 0 : index
    %0 = vector.load %arg1[%c0, %c0_0, %c0_1] : memref<1x4x256xf32, #tpu.memory_space<vmem>>, vector<1x4x222xf32>
    %1 = vector.shape_cast %0 : vector<1x4x222xf32> to vector<4x222xf32>
    %c0_2 = arith.constant 0 : index
    %c0_3 = arith.constant 0 : index
    %2 = vector.load %arg4[%c0_2, %c0_3] : memref<36x222xf32, #tpu.memory_space<vmem>>, vector<4x222xf32>
    tpu.vector_store %arg4[%c0_2, %c0_3], %1 {strides = array<i32>} : memref<36x222xf32, #tpu.memory_space<vmem>>, vector<4x222xf32>,
    %c0_4 = arith.constant 0 : index
    %c0_5 = arith.constant 0 : index
    %c1 = arith.constant 1 : index
    %3 = vector.load %arg1[%c0_4, %c0_5, %c1] : memref<1x4x256xf32, #tpu.memory_space<vmem>>, vector<1x4x222xf32>
    %4 = vector.shape_cast %3 : vector<1x4x222xf32> to vector<4x222xf32>
    %c4 = arith.constant 4 : index
    %c0_6 = arith.constant 0 : index
    %5 = vector.load %arg4[%c4, %c0_6] : memref<36x222xf32, #tpu.memory_space<vmem>>, vector<4x222xf32>
    tpu.vector_store %arg4[%c4, %c0_6], %4 {strides = array<i32>} : memref<36x222xf32, #tpu.memory_space<vmem>>, vector<4x222xf32>,
    %c0_7 = arith.constant 0 : index
    %c0_8 = arith.constant 0 : index
    %c2 = arith.constant 2 : index
    %6 = vector.load %arg1[%c0_7, %c0_8, %c2] : memref<1x4x256xf32, #tpu.memory_space<vmem>>, vector<1x4x222xf32>
    %7 = vector.shape_cast %6 : vector<1x4x222xf32> to vector<4x222xf32>
    %c8 = arith.constant 8 : index
    %c0_9 = arith.constant 0 : index
    %8 = vector.load %arg4[%c8, %c0_9] : memref<36x222xf32, #tpu.memory_space<vmem>>, vector<4x222xf32>
    tpu.vector_store %arg4[%c8, %c0_9], %7 {strides = array<i32>} : memref<36x222xf32, #tpu.memory_space<vmem>>, vector<4x222xf32>,
    %c0_10 = arith.constant 0 : index
    %c0_11 = arith.constant 0 : index
    %c16 = arith.constant 16 : index
    %9 = vector.load %arg1[%c0_10, %c0_11, %c16] : memref<1x4x256xf32, #tpu.memory_space<vmem>>, vector<1x4x222xf32>
    %10 = vector.shape_cast %9 : vector<1x4x222xf32> to vector<4x222xf32>
    %c12 = arith.constant 12 : index
    %c0_12 = arith.constant 0 : index
    %11 = vector.load %arg4[%c12, %c0_12] : memref<36x222xf32, #tpu.memory_space<vmem>>, vector<4x222xf32>
    tpu.vector_store %arg4[%c12, %c0_12], %10 {strides = array<i32>} : memref<36x222xf32, #tpu.memory_space<vmem>>, vector<4x222xf32>,
    %c0_13 = arith.constant 0 : index
    %c0_14 = arith.constant 0 : index
    %c17 = arith.constant 17 : index
    %12 = vector.load %arg1[%c0_13, %c0_14, %c17] : memref<1x4x256xf32, #tpu.memory_space<vmem>>, vector<1x4x222xf32>
    %13 = vector.shape_cast %12 : vector<1x4x222xf32> to vector<4x222xf32>
    %c16_15 = arith.constant 16 : index
    %c0_16 = arith.constant 0 : index
    %14 = vector.load %arg4[%c16_15, %c0_16] : memref<36x222xf32, #tpu.memory_space<vmem>>, vector<4x222xf32>
    tpu.vector_store %arg4[%c16_15, %c0_16], %13 {strides = array<i32>} : memref<36x222xf32, #tpu.memory_space<vmem>>, vector<4x222xf32>,
    %c0_17 = arith.constant 0 : index
    %c0_18 = arith.constant 0 : index
    %c18 = arith.constant 18 : index
    %15 = vector.load %arg1[%c0_17, %c0_18, %c18] : memref<1x4x256xf32, #tpu.memory_space<vmem>>, vector<1x4x222xf32>
    %16 = vector.shape_cast %15 : vector<1x4x222xf32> to vector<4x222xf32>
    %c20 = arith.constant 20 : index
    %c0_19 = arith.constant 0 : index
    %17 = vector.load %arg4[%c20, %c0_19] : memref<36x222xf32, #tpu.memory_space<vmem>>, vector<4x222xf32>
    tpu.vector_store %arg4[%c20, %c0_19], %16 {strides = array<i32>} : memref<36x222xf32, #tpu.memory_space<vmem>>, vector<4x222xf32>,
    %c0_20 = arith.constant 0 : index
    %c0_21 = arith.constant 0 : index
    %c32 = arith.constant 32 : index
    %18 = vector.load %arg1[%c0_20, %c0_21, %c32] : memref<1x4x256xf32, #tpu.memory_space<vmem>>, vector<1x4x222xf32>
    %19 = vector.shape_cast %18 : vector<1x4x222xf32> to vector<4x222xf32>
    %c24 = arith.constant 24 : index
    %c0_22 = arith.constant 0 : index
    %20 = vector.load %arg4[%c24, %c0_22] : memref<36x222xf32, #tpu.memory_space<vmem>>, vector<4x222xf32>
    tpu.vector_store %arg4[%c24, %c0_22], %19 {strides = array<i32>} : memref<36x222xf32, #tpu.memory_space<vmem>>, vector<4x222xf32>,
    %c0_23 = arith.constant 0 : index
    %c0_24 = arith.constant 0 : index
    %c33 = arith.constant 33 : index
    %21 = vector.load %arg1[%c0_23, %c0_24, %c33] : memref<1x4x256xf32, #tpu.memory_space<vmem>>, vector<1x4x222xf32>
    %22 = vector.shape_cast %21 : vector<1x4x222xf32> to vector<4x222xf32>
    %c28 = arith.constant 28 : index
    %c0_25 = arith.constant 0 : index
    %23 = vector.load %arg4[%c28, %c0_25] : memref<36x222xf32, #tpu.memory_space<vmem>>, vector<4x222xf32>
    tpu.vector_store %arg4[%c28, %c0_25], %22 {strides = array<i32>} : memref<36x222xf32, #tpu.memory_space<vmem>>, vector<4x222xf32>,
    %c0_26 = arith.constant 0 : index
    %c0_27 = arith.constant 0 : index
    %c34 = arith.constant 34 : index
    %24 = vector.load %arg1[%c0_26, %c0_27, %c34] : memref<1x4x256xf32, #tpu.memory_space<vmem>>, vector<1x4x222xf32>
    %25 = vector.shape_cast %24 : vector<1x4x222xf32> to vector<4x222xf32>
    %c32_28 = arith.constant 32 : index
    %c0_29 = arith.constant 0 : index
    %26 = vector.load %arg4[%c32_28, %c0_29] : memref<36x222xf32, #tpu.memory_space<vmem>>, vector<4x222xf32>
    tpu.vector_store %arg4[%c32_28, %c0_29], %25 {strides = array<i32>} : memref<36x222xf32, #tpu.memory_space<vmem>>, vector<4x222xf32>,
    %c0_30 = arith.constant 0 : index
    %c0_31 = arith.constant 0 : index
    %27 = vector.load %arg2[%c0_30, %c0_31] : memref<8x36xf32, #tpu.memory_space<vmem>>, vector<8x36xf32>
    %c0_32 = arith.constant 0 : index
    %c0_33 = arith.constant 0 : index
    %28 = vector.load %arg4[%c0_32, %c0_33] : memref<36x222xf32, #tpu.memory_space<vmem>>, vector<36x222xf32>
    %cst = arith.constant dense<0.000000e+00> : vector<8x222xf32>
    %29 = tpu.matmul %27, %28, %cst {dimension_numbers = #tpu.dot_dimension_numbers<[1], [0], [0], [1], [0, 0, 1, 1], [], []>} : vector<8x36xf32>, vector<36x222xf32>, vector<8x222xf32> -> vector<8x222xf32>
    %c0_34 = arith.constant 0 : index
    %c0_35 = arith.constant 0 : index
    %c0_36 = arith.constant 0 : index
    %30 = vector.load %arg3[%c0_34, %c0_35, %c0_36] : memref<1x8x222xf32, #tpu.memory_space<vmem>>, vector<1x8x222xf32>
    %31 = vector.shape_cast %30 : vector<1x8x222xf32> to vector<8x222xf32>
    %32 = vector.shape_cast %29 : vector<8x222xf32> to vector<1x8x222xf32>
    tpu.vector_store %arg3[%c0_34, %c0_35, %c0_36], %32 {strides = array<i32>} : memref<1x8x222xf32, #tpu.memory_space<vmem>>, vector<1x8x222xf32>,
    return
  }
  func.func @transform_0(%arg0: i32) -> (i32, i32, i32) {
    %c0_i32 = arith.constant 0 : i32
    %c0_i32_0 = arith.constant 0 : i32
    %c0_i32_1 = arith.constant 0 : i32
    return %arg0, %c0_i32, %c0_i32_0 : i32, i32, i32
  }
  func.func @transform_1(%arg0: i32) -> (i32, i32) {
    %c0_i32 = arith.constant 0 : i32
    %c0_i32_0 = arith.constant 0 : i32
    %c0_i32_1 = arith.constant 0 : i32
    return %c0_i32, %c0_i32_0 : i32, i32
  }
  func.func @transform_2(%arg0: i32) -> (i32, i32, i32) {
    %c0_i32 = arith.constant 0 : i32
    %c0_i32_0 = arith.constant 0 : i32
    %c0_i32_1 = arith.constant 0 : i32
    return %arg0, %c0_i32, %c0_i32_0 : i32, i32, i32
  }
}

</mosaic_0001>

<llo_original>
// kernel: tpu_custom_call.1
$region0: #{tpu_custom_call.1}
  #allocation0 [shape = 'u32[]', space=smem, size = 0x4, offset = 0x4, fixed_abs, tag = 'smem constant byte address 0x4 - core index']
  #allocation1 [shape = 'u32[144,128]{1,0:T(1,128)}', space=vmem, size = 0x12000, scoped, tag = 'internal scratch']
  #allocation2 [shape = 'f32[36,222]{1,0:T(8,128)}', space=vmem, size = 0xa000, scoped, tag = 'scratch operand']
  %s0 = inlined_call_operand.hbm [shape: f32[2,4,256], index: 0, kind: input, shape index: {}]
  %s1 = inlined_call_operand.hbm [shape: f32[8,36], index: 1, kind: input, shape index: {}]
  %s2 = inlined_call_operand.hbm [shape: f32[2,8,222], index: 2, kind: output, shape index: {}]
  %s3 = sld [smem:[#allocation0]]
  $region49: #{tpu_custom_call.1} parent=0
    _
  %s5 = ssub.s32 1, %s3
  %s6 = scalar_select 0, %s5, %s3
  $region1: #{tpu_custom_call.1} parent=0
    #allocation3 [shape = 'u8[8192]{0}', space=vmem, size = 0x2000, scoped, tag = 'input window, operand 0']
    #allocation4 [shape = 's32[2]{0}', space=sflag, size = 0x8, scoped, tag = 'scoped memory for tpu_custom_call.1']
    #allocation5 [shape = 's32[2]{0}', space=sflag, size = 0x8, scoped, tag = 'scoped memory for tpu_custom_call.1']
    #allocation6 [shape = 'u8[4096]{0}', space=vmem, size = 0x1000, scoped, tag = 'input window, operand 1, single buffered']
    #allocation7 [shape = 's32[1]{0}', space=sflag, size = 0x4, scoped, tag = 'scoped memory for tpu_custom_call.1']
    #allocation8 [shape = 'u8[16384]{0}', space=vmem, size = 0x4000, scoped, tag = 'output window, operand 0']
    %7 = vsyncpa [#allocation4], 0
    %s8 = scalar_lea.sflag [#allocation4], 1
    %9 = vsyncpa %s8, 0
    %10 = vsyncpa [#allocation7], 0
    %11 = vsyncpa [#allocation5], 0
    %s12 = scalar_lea.sflag [#allocation5], 1
    %13 = vsyncpa %s12, 0
    loop: start=0, step=1, limit=4
    $region2: #{tpu_custom_call.1} parent=1 // loop_pre_header
      _
    $region3: #{tpu_custom_call.1} parent=1 // loop_header
      %s15 = sphi 0, %s19
      %p16 = scmp.ge.s32.totalorder %s15, 4
      %s25 = sphi 0, %s27
      %s28 = sphi 0, %s25
      %s29 = sphi 0, %s28
      %s45 = sphi 0, %s29
      %s49 = sphi 0, %s49
      %s51 = sphi 0, %s49
      %s52 = sphi 0, %s51
      %s66 = sphi 0, %s52
      %s72 = sphi 0, %s74
      %s75 = sphi 0, %s72
      %s76 = sphi 0, %s75
      %s92 = sphi 0, %s76
    $region4: #{tpu_custom_call.1} parent=1 // loop_header_branch
      %18 = sbr.rel (%p16) target = $region8
    $region5: #{tpu_custom_call.1} parent=1 // loop_body
      %s20 = ssub.s32 %s15, 1
      %s21 = ssub.s32 %s15, 2
      %s22 = sadd.s32 %s15, 1
      %s23 = ssub.s32 %s15, %s22
      %p24 = scmp.eq.s32.totalorder %s23, 0
      %s26 = sadd.s32 %s25, 1
      %s27 = scalar_select %p24, %s25, %s26
      %p30 = pneg %p24
      %p31 = scmp.eq.s32.totalorder %s15, 1
      %p32 = por %p30, %p31
      %p33 = scmp.ne.s32.totalorder %s25, %s28
      %p34 = scmp.eq.s32.totalorder %s15, 0
      %p35 = por %p33, %p34
      %p36 = scmp.ne.s32.totalorder %s25, %s28
      %p37 = scmp.eq.s32.totalorder %s20, 1
      %p38 = por %p36, %p37
      %p39 = scmp.ne.s32.totalorder %s28, %s29
      %p40 = scmp.eq.s32.totalorder %s20, 0
      %p41 = por %p39, %p40
      %p42 = scmp.ne.s32.totalorder %s28, %s29
      %p43 = scmp.eq.s32.totalorder %s21, 1
      %p44 = por %p42, %p43
      %p46 = scmp.ne.s32.totalorder %s29, %s45
      %p47 = scmp.eq.s32.totalorder %s21, 0
      %p48 = por %p46, %p47
      %s50 = sadd.s32 %s49, 1
      %p53 = scmp.eq.s32.totalorder %s15, 1
      %p54 = scmp.ne.s32.totalorder %s49, %s51
      %p55 = scmp.eq.s32.totalorder %s15, 0
      %p56 = por %p54, %p55
      %p57 = scmp.ne.s32.totalorder %s49, %s51
      %p58 = scmp.eq.s32.totalorder %s20, 1
      %p59 = por %p57, %p58
      %p60 = scmp.ne.s32.totalorder %s51, %s52
      %p61 = scmp.eq.s32.totalorder %s20, 0
      %p62 = por %p60, %p61
      %p63 = scmp.ne.s32.totalorder %s51, %s52
      %p64 = scmp.eq.s32.totalorder %s21, 1
      %p65 = por %p63, %p64
      %p67 = scmp.ne.s32.totalorder %s52, %s66
      %p68 = scmp.eq.s32.totalorder %s21, 0
      %p69 = por %p67, %p68
      %s70 = ssub.s32 %s15, %s22
      %p71 = scmp.eq.s32.totalorder %s70, 0
      %s73 = sadd.s32 %s72, 1
      %s74 = scalar_select %p71, %s72, %s73
      %p77 = pneg %p71
      %p78 = scmp.eq.s32.totalorder %s15, 1
      %p79 = por %p77, %p78
      %p80 = scmp.ne.s32.totalorder %s72, %s75
      %p81 = scmp.eq.s32.totalorder %s15, 0
      %p82 = por %p80, %p81
      %p83 = scmp.ne.s32.totalorder %s72, %s75
      %p84 = scmp.eq.s32.totalorder %s20, 1
      %p85 = por %p83, %p84
      %p86 = scmp.ne.s32.totalorder %s75, %s76
      %p87 = scmp.eq.s32.totalorder %s20, 0
      %p88 = por %p86, %p87
      %p89 = scmp.ne.s32.totalorder %s75, %s76
      %p90 = scmp.eq.s32.totalorder %s21, 1
      %p91 = por %p89, %p90
      %p93 = scmp.ne.s32.totalorder %s76, %s92
      %p94 = scmp.eq.s32.totalorder %s21, 0
      %p95 = por %p93, %p94
      %p96 = scmp.le.s32.totalorder 1, %s15
      %p97 = scmp.lt.s32.totalorder %s15, 3
      %p98 = pnand %p96, %p97
      %p99 = pneg %p98
      // Predicated region
      $region9: #{tpu_custom_call.1} parent=5 // pred_check
        _
      $region10: #{tpu_custom_call.1} parent=5 // pred_check_branch
        %101 = sbr.rel (%p98) target = $region12
      $region11: #{tpu_custom_call.1} parent=5 // pred_region
        %s102 = ssub.s32 %s15, 1
        // Predicated region
        $region13: #{tpu_custom_call.1} parent=11 // pred_check
          %p103 = pneg %p62
        $region14: #{tpu_custom_call.1} parent=11 // pred_check_branch
          %105 = sbr.rel (%p103) target = $region16
        $region15: #{tpu_custom_call.1} parent=11 // pred_region
          %s107 = ssub.s32 128, 128
          %108 = vsyncadd [#allocation7], %s107
          %s110 = sshll.u32 [#allocation6], 4
          %s111 = int_to_ptr.vmem [resolvable:$true] %s110
          %113 = dma.hbm_to_vmem [thread:$0]  %s1, 128, %s111, [#allocation7]
        $region16: #{tpu_custom_call.1} parent=11 // pred_fallthru
          _
      $region12: #{tpu_custom_call.1} parent=5 // pred_fallthru
        _
      %p114 = scmp.lt.s32.totalorder %s15, 2
      // Predicated region
      $region17: #{tpu_custom_call.1} parent=5 // pred_check
        %p115 = pneg %p114
      $region18: #{tpu_custom_call.1} parent=5 // pred_check_branch
        %117 = sbr.rel (%p115) target = $region20
      $region19: #{tpu_custom_call.1} parent=5 // pred_region
        // Predicated region
        $region21: #{tpu_custom_call.1} parent=19 // pred_check
          %p118 = pneg %p35
        $region22: #{tpu_custom_call.1} parent=19 // pred_check_branch
          %120 = sbr.rel (%p118) target = $region24
        $region23: #{tpu_custom_call.1} parent=19 // pred_region
          %s121 = sand.u32 %s25, 1
          %s122 = scalar_lea.sflag [#allocation4], %s121
          %s123 = sand.u32 %s25, 1
          %s124 = smul.addr %s123, 8
          %s125 = scalar_lea.vmem [#allocation3], %s124
          %s127 = ssub.s32 128, 128
          %128 = vsyncadd %s122, %s127
          %s129 = smul.addr %s15, 2
          %s130 = smul.addr %s129, 64
          %s131 = scalar_lea.hbm %s0, %s130
          %s133 = sshll.u32 %s125, 4
          %s134 = int_to_ptr.vmem [resolvable:$true] %s133
          %136 = dma.hbm_to_vmem [thread:$0]  %s131, 128, %s134, %s122
        $region24: #{tpu_custom_call.1} parent=19 // pred_fallthru
          _
      $region20: #{tpu_custom_call.1} parent=5 // pred_fallthru
        _
      %p137 = scmp.le.s32.totalorder 1, %s15
      %p138 = scmp.lt.s32.totalorder %s15, 3
      %p139 = pnand %p137, %p138
      %p140 = pneg %p139
      // Predicated region
      $region25: #{tpu_custom_call.1} parent=5 // pred_check
        _
      $region26: #{tpu_custom_call.1} parent=5 // pred_check_branch
        %142 = sbr.rel (%p139) target = $region28
      $region27: #{tpu_custom_call.1} parent=5 // pred_region
        %s143 = ssub.s32 %s15, 1
        %s144 = sand.u32 %s28, 1
        %s145 = scalar_lea.sflag [#allocation4], %s144
        %s146 = sand.u32 %s28, 1
        %s147 = smul.addr %s146, 8
        %s148 = scalar_lea.vmem [#allocation3], %s147
        // Predicated region
        $region29: #{tpu_custom_call.1} parent=27 // pred_check
          %p149 = pneg %p41
        $region30: #{tpu_custom_call.1} parent=27 // pred_check_branch
          %151 = sbr.rel (%p149) target = $region32
        $region31: #{tpu_custom_call.1} parent=27 // pred_region
          %152 = dma.done %s145, 128
        $region32: #{tpu_custom_call.1} parent=27 // pred_fallthru
          _
        // Predicated region
        $region33: #{tpu_custom_call.1} parent=27 // pred_check
          %p153 = pneg %p62
        $region34: #{tpu_custom_call.1} parent=27 // pred_check_branch
          %155 = sbr.rel (%p153) target = $region36
        $region35: #{tpu_custom_call.1} parent=27 // pred_region
          %156 = dma.done [#allocation7], 128
        $region36: #{tpu_custom_call.1} parent=27 // pred_fallthru
          _
        %s157 = sand.u32 %s28, 1
        %s158 = scalar_lea.sflag [#allocation4], %s157
        %s159 = sand.u32 %s28, 1
        %s160 = smul.addr %s159, 8
        %s161 = scalar_lea.vmem [#allocation3], %s160
        %p162 = pneg %p41
        %p163 = pneg %p38
        %p164 = pneg %p62
        %p165 = pneg %p59
        %p166 = pneg %p88
        %p167 = pneg %p85
        %s168 = sand.u32 %s75, 1
        %s169 = scalar_lea.sflag [#allocation5], %s168
        %s170 = sand.u32 %s75, 1
        %s171 = smul.addr %s170, 16
        %s172 = scalar_lea.vmem [#allocation8], %s171
        %v173 = vld [vmem:[%s148] sm:$0xff]
        %v175 = vcombine.high %v173, %v173
        %177 = vst [vmem:[#allocation2] sm:$0xf] %v173
        %vm178 = vcmask 764928
        %179 = vst.msk [vmem:[#allocation2 + $0x8] sm:$0xf] %vm178, %v175
        %v180 = vld [vmem:[%s148] sm:$0xff]
        %v182 = vcombine.low %v180, %v180
        %183 = vrot.lane.b32.xlu0 %v182, 127
        %v184 = vpop.permute.xlu0 %183
        %185 = vrot.lane.b32.xlu0 %v180, 127
        %v186 = vpop.permute.xlu0 %185
        %vm187 = vcmask 1039360
        %v188 = vsel %vm187, %v184, %v186
        %191 = vst [vmem:[#allocation2] sm:$0xf0] %v188
        %vm192 = vcmask 769028
        %193 = vst.msk [vmem:[#allocation2 + $0x8] sm:$0xf0] %vm192, %v186
        %v194 = vld [vmem:[%s148] sm:$0xff]
        %v196 = vcombine.high %v194, %v194
        %197 = vrot.lane.b32.xlu0 %v194, 126
        %v198 = vpop.permute.xlu0 %197
        %199 = vrot.lane.b32.xlu0 %v196, 126
        %v200 = vpop.permute.xlu0 %199
        %vm201 = vcmask 1031168
        %v202 = vsel %vm201, %v198, %v200
        %205 = vst [vmem:[#allocation2 + $0x10] sm:$0xf] %v202
        %206 = vst.msk [vmem:[#allocation2 + $0x18] sm:$0xf] %vm178, %v200
        %v207 = vld [vmem:[%s148] sm:$0xff]
        %v209 = vcombine.low %v207, %v207
        %210 = vrot.lane.b32.xlu0 %v209, 112
        %v211 = vpop.permute.xlu0 %210
        %212 = vrot.lane.b32.xlu0 %v207, 112
        %v213 = vpop.permute.xlu0 %212
        %vm214 = vcmask 916480
        %v215 = vsel %vm214, %v211, %v213
        %218 = vst [vmem:[#allocation2 + $0x10] sm:$0xf0] %v215
        %219 = vst.msk [vmem:[#allocation2 + $0x18] sm:$0xf0] %vm192, %v213
        %v220 = vld [vmem:[%s148] sm:$0xff]
        %v222 = vcombine.high %v220, %v220
        %223 = vrot.lane.b32.xlu0 %v220, 111
        %v224 = vpop.permute.xlu0 %223
        %225 = vrot.lane.b32.xlu0 %v222, 111
        %v226 = vpop.permute.xlu0 %225
        %vm227 = vcmask 908288
        %v228 = vsel %vm227, %v224, %v226
        %231 = vst [vmem:[#allocation2 + $0x20] sm:$0xf] %v228
        %232 = vst.msk [vmem:[#allocation2 + $0x28] sm:$0xf] %vm178, %v226
        %v233 = vld [vmem:[%s148] sm:$0xff]
        %v235 = vcombine.low %v233, %v233
        %236 = vrot.lane.b32.xlu0 %v235, 110
        %v237 = vpop.permute.xlu0 %236
        %238 = vrot.lane.b32.xlu0 %v233, 110
        %v239 = vpop.permute.xlu0 %238
        %vm240 = vcmask 900096
        %v241 = vsel %vm240, %v237, %v239
        %244 = vst [vmem:[#allocation2 + $0x20] sm:$0xf0] %v241
        %245 = vst.msk [vmem:[#allocation2 + $0x28] sm:$0xf0] %vm192, %v239
        %v246 = vld [vmem:[%s148] sm:$0xff]
        %v248 = vcombine.high %v246, %v246
        %249 = vrot.lane.b32.xlu0 %v246, 96
        %v250 = vpop.permute.xlu0 %249
        %251 = vrot.lane.b32.xlu0 %v248, 96
        %v252 = vpop.permute.xlu0 %251
        %vm253 = vcmask 785408
        %v254 = vsel %vm253, %v250, %v252
        %257 = vst [vmem:[#allocation2 + $0x30] sm:$0xf] %v254
        %258 = vst.msk [vmem:[#allocation2 + $0x38] sm:$0xf] %vm178, %v252
        %v259 = vld [vmem:[%s148] sm:$0xff]
        %v261 = vcombine.low %v259, %v259
        %262 = vrot.lane.b32.xlu0 %v261, 95
        %v263 = vpop.permute.xlu0 %262
        %264 = vrot.lane.b32.xlu0 %v259, 95
        %v265 = vpop.permute.xlu0 %264
        %vm266 = vcmask 777216
        %v267 = vsel %vm266, %v263, %v265
        %270 = vst [vmem:[#allocation2 + $0x30] sm:$0xf0] %v267
        %271 = vst.msk [vmem:[#allocation2 + $0x38] sm:$0xf0] %vm192, %v265
        %v272 = vld [vmem:[%s148] sm:$0xff]
        %v274 = vcombine.high %v272, %v272
        %275 = vrot.lane.b32.xlu0 %v272, 94
        %v276 = vpop.permute.xlu0 %275
        %277 = vrot.lane.b32.xlu0 %v274, 94
        %v278 = vpop.permute.xlu0 %277
        %vm279 = vcmask 769024
        %v280 = vsel %vm279, %v276, %v278
        %283 = vst [vmem:[#allocation2 + $0x40] sm:$0xf] %v280
        %284 = vst.msk [vmem:[#allocation2 + $0x48] sm:$0xf] %vm178, %v278
        %v285 = vld [vmem:[#allocation6] sm:$0xff]
        %v286 = vld [vmem:[#allocation2] sm:$0xff]
        %v287 = vld [vmem:[#allocation2 + $0x8] sm:$0xff]
        %v288 = vld [vmem:[#allocation2 + $0x10] sm:$0xff]
        %v289 = vld [vmem:[#allocation2 + $0x18] sm:$0xff]
        %v290 = vld [vmem:[#allocation2 + $0x20] sm:$0xff]
        %v291 = vld [vmem:[#allocation2 + $0x28] sm:$0xff]
        %v292 = vld [vmem:[#allocation2 + $0x30] sm:$0xff]
        %v293 = vld [vmem:[#allocation2 + $0x38] sm:$0xff]
        %v294 = vld [vmem:[#allocation2 + $0x40] sm:$0xf]
        %v295 = vld [vmem:[#allocation2 + $0x48] sm:$0xf]
        %vm296 = vcmask 293888
        %v298 = vsel %vm296, %v285, 0
        %vm300 = vcmask 1043456
        %v302 = vsel %vm300, %v294, 0
        %v305 = vsel %vm300, %v295, 0
        %307 = vmatprep.subr.mxu0 %v287
        %308 = vmatpush1.msra.mxu0 %v286
        %309 = vmatprep.subr.mxu0 %v289
        %310 = vmatpush1.msra.mxu0 %v288
        %311 = vmatprep.subr.mxu0 %v291
        %312 = vmatpush1.msra.mxu0 %v290
        %313 = vmatprep.subr.mxu0 %v293
        %314 = vmatpush1.msra.mxu0 %v292
        %315 = vmatprep.subr.mxu0 %v305
        %316 = vmatpush1.msra.mxu0 %v302
        %317 = vmatprep.subr.mxu0 0.0
        %318 = vmatpush1.msra.mxu0 0.0
        %319 = vmatprep.subr.mxu0 0.0
        %320 = vmatpush1.msra.mxu0 0.0
        %321 = vmatprep.subr.mxu0 0.0
        %322 = vmatpush1.msra.mxu0 0.0
        %323 = vmatprep.subr.mxu0 0.0
        %324 = vmatpush1.msra.mxu0 0.0
        %325 = vmatprep.subr.mxu0 0.0
        %326 = vmatpush1.msra.mxu0 0.0
        %327 = vmatprep.subr.mxu0 0.0
        %328 = vmatpush1.msra.mxu0 0.0
        %329 = vmatprep.subr.mxu0 0.0
        %330 = vmatpush1.msra.mxu0 0.0
        %331 = vmatprep.subr.mxu0 0.0
        %332 = vmatpush1.msra.mxu0 0.0
        %333 = vmatprep.subr.mxu0 0.0
        %334 = vmatpush1.msra.mxu0 0.0
        %335 = vmatprep.subr.mxu0 0.0
        %336 = vmatpush1.msra.mxu0 0.0
        %337 = vmatprep.subr.mxu0 0.0
        %338 = vmatpush1.msra.mxu0 0.0
        %339 = vmatprep.subr.mxu0 0.0
        %340 = vmatpush1.msra.mxu0 0.0
        %341 = vmatprep.subr.mxu0 0.0
        %342 = vmatpush1.msra.mxu0 0.0
        %343 = vmatprep.subr.mxu0 0.0
        %344 = vmatpush1.msra.mxu0 0.0
        %345 = vmatprep.subr.mxu0 0.0
        %346 = vmatpush1.msra.mxu0 0.0
        %347 = vmatprep.subr.mxu0 0.0
        %348 = vmatpush1.msra.mxu0 0.0
        %349 = vmatprep.subr.mxu0 0.0
        %350 = vmatpush1.msra.mxu0 0.0
        %351 = vmatprep.subr.mxu0 0.0
        %352 = vmatpush1.msra.mxu0 0.0
        %353 = vmatprep.subr.mxu0 0.0
        %354 = vmatpush1.msra.mxu0 0.0
        %355 = vmatprep.subr.mxu0 0.0
        %356 = vmatpush1.msra.mxu0 0.0
        %357 = vmatprep.subr.mxu0 0.0
        %358 = vmatpush1.msra.mxu0 0.0
        %359 = vmatprep.subr.mxu0 0.0
        %360 = vmatpush1.msra.mxu0 0.0
        %361 = vmatprep.subr.mxu0 0.0
        %362 = vmatpush1.msra.mxu0 0.0
        %363 = vmatprep.subr.mxu0 0.0
        %364 = vmatpush1.msra.mxu0 0.0
        %365 = vmatprep.subr.mxu0 0.0
        %366 = vmatpush1.msra.mxu0 0.0
        %367 = vmatprep.subr.mxu0 0.0
        %368 = vmatpush1.msra.mxu0 0.0
        %369 = vmatprep.subr.mxu0 0.0
        %370 = vmatpush1.msra.mxu0 0.0
        %371 = vmatprep.mubr.f32.mxu0 0.0
        %372 = vmatmul.mubr.f32.gmra.mrb[0].mxu0 %v298
        %v373 = vpop.f32.mrb[0].mxu0
        %v374 = vadd.f32 0.0, %v373
        %v375 = vpop.f32.mrb[0].mxu0
        %v376 = vadd.f32 0.0, %v375
        %377 = vdwg.mxu0
        %378 = vst [vmem:[%s172] sm:$0xff] %v374
        %379 = vst.msk [vmem:[%s172 + $0x8] sm:$0xff] %vm279, %v376
        %s380 = sand.u32 %s75, 1
        %s381 = scalar_lea.sflag [#allocation5], %s380
        %s382 = sand.u32 %s75, 1
        %s383 = smul.addr %s382, 16
        %s384 = scalar_lea.vmem [#allocation8], %s383
        // Predicated region
        $region37: #{tpu_custom_call.1} parent=27 // pred_check
          %p385 = pneg %p85
        $region38: #{tpu_custom_call.1} parent=27 // pred_check_branch
          %387 = sbr.rel (%p385) target = $region40
        $region39: #{tpu_custom_call.1} parent=27 // pred_region
          %s389 = ssub.s32 256, 256
          %390 = vsyncadd %s381, %s389
          %s391 = smul.addr %s20, 2
          %s392 = smul.addr %s391, 128
          %s393 = scalar_lea.hbm %s2, %s392
          %s395 = sshll.u32 %s384, 4
          %s396 = int_to_ptr.vmem [resolvable:$true] %s395
          %398 = dma.vmem_to_hbm [thread:$0]  %s396, 256, %s393, %s381
        $region40: #{tpu_custom_call.1} parent=27 // pred_fallthru
          _
      $region28: #{tpu_custom_call.1} parent=5 // pred_fallthru
        _
      %p399 = scmp.le.s32.totalorder 2, %s15
      // Predicated region
      $region41: #{tpu_custom_call.1} parent=5 // pred_check
        %p400 = pneg %p399
      $region42: #{tpu_custom_call.1} parent=5 // pred_check_branch
        %402 = sbr.rel (%p400) target = $region44
      $region43: #{tpu_custom_call.1} parent=5 // pred_region
        %s403 = ssub.s32 %s15, 2
        // Predicated region
        $region45: #{tpu_custom_call.1} parent=43 // pred_check
          %p404 = pneg %p91
        $region46: #{tpu_custom_call.1} parent=43 // pred_check_branch
          %406 = sbr.rel (%p404) target = $region48
        $region47: #{tpu_custom_call.1} parent=43 // pred_region
          %s407 = sand.u32 %s76, 1
          %s408 = scalar_lea.sflag [#allocation5], %s407
          %s409 = sand.u32 %s76, 1
          %s410 = smul.addr %s409, 16
          %s411 = scalar_lea.vmem [#allocation8], %s410
          %412 = dma.done %s408, 256
        $region48: #{tpu_custom_call.1} parent=43 // pred_fallthru
          _
      $region44: #{tpu_custom_call.1} parent=5 // pred_fallthru
        _
    $region6: #{tpu_custom_call.1} parent=1 // loop_footer
      %s19 = sadd.s32 1, %s15
    $region7: #{tpu_custom_call.1} parent=1 // loop_footer_branch
      %14 = sbr.rel target = $region3
    $region8: #{tpu_custom_call.1} parent=1 // loop_exit
      _
    %413 = vsyncpa [#allocation4], 1
    %s414 = scalar_lea.sflag [#allocation4], 1
    %415 = vsyncpa %s414, 1
    %416 = vsyncpa [#allocation7], 1
    %417 = vsyncpa [#allocation5], 1
    %s418 = scalar_lea.sflag [#allocation5], 1
    %419 = vsyncpa %s418, 1

</llo_original>
